<compile_context>
chip_gen: v7x
topology: tpu7x:2x2x1
jax: 0.10.0
libtpu: 0.0.40
codegen_flags: <defaults>
</compile_context>

<pallas_src>
import jax
import jax.numpy as jnp
from jax.experimental import pallas as pl
from jax.experimental.pallas import tpu as pltpu


def _pick_tile_rows(H, W, min_lanes=128):
    """Smallest row-tile th dividing H with a lane-dense (th*W % 128 == 0) output."""
    for th in range(1, H):
        if H % th == 0 and (th * W) % 128 == 0 and th * W >= min_lanes:
            return th
    return H


def _make_kernel(H, W, C, th):
    NRB = H // th
    L1 = (th + 2) * W          # conv1 output window (tile rows + 1-row halo each side)
    L2 = th * W                # conv2 / output tile
    LX = (th + 4) * W          # x rows feeding the conv1 window
    F = 128                    # 128-aligned interior start of the padded scratches
    PADX = F + LX + 128        # x-window scratch length   (f32)
    PADH = F + L1 + 128        # h1-window scratch length  (bf16)

    def kernel(x_ref, w1_ref, b1_ref, w2_ref, b2_ref, m_ref, o_ref,
               xp_ref, hp_ref, col_ref):
        # x_ref : (1, C, (H+4)*W) f32   full image, 2 zero rows top/bottom
        # w*_ref: (C, 9*C)        bf16  tap-fused, BN-scale-folded conv weights
        # b*_ref: (C, 1)          f32   folded BatchNorm bias
        # m_ref : (2, L1)         f32   [mask_left; mask_right] (1.0 = valid lane)
        # o_ref : (1, C, L2)      f32
        # xp_ref: (C, PADX)       f32   staged x window   (rows r0-2 .. r0+th+2)
        # hp_ref: (C, PADH)       bf16  staged h1 window  (rows r0-1 .. r0+th+1)
        # col_ref:(9*C, L1)       bf16  shared im2col buffer for both convs
        rb = pl.program_id(1)
        ml = m_ref[0:1, :] > 0.5          # output col != 0      (kw == 0 taps)
        mr = m_ref[1:2, :] > 0.5          # output col != W - 1  (kw == 2 taps)

        def build_im2col(patch_fn, L):
            # Tap-fused im2col: rows [t*C, (t+1)*C) hold the tap-t shifted patch.
            # Masks are applied to the *shifted* patch (output-lane coordinates).
            for kh in range(3):
                for kw in range(3):
                    p = patch_fn(kh, kw)
                    if kw == 0:
                        p = jnp.where(ml[:, :L], p, 0)
                    elif kw == 2:
                        p = jnp.where(mr[:, :L], p, 0)
                    t = kh * 3 + kw
                    col_ref[t * C:(t + 1) * C, :L] = p.astype(col_ref.dtype)

        # ---- stage the x window (single 128-aligned dynamic slice) -------
        start = rb * (th * W)
        if (th * W) % 128 == 0:
            start = pl.multiple_of(start, 128)
        xp_ref[:, F:F + LX] = x_ref[0, :, pl.ds(start, LX)]

        # ---- conv1 + folded BN1 + ReLU  (bf16 MXU, f32 accumulate) -------
        def x_patch(kh, kw):
            s = F + kh * W + kw - 1                       # static offset
            return xp_ref[:, s:s + L1]

        build_im2col(x_patch, L1)
        h1 = jnp.dot(w1_ref[...], col_ref[...],
                     preferred_element_type=jnp.float32)
        h1 = jnp.maximum(h1 + b1_ref[...], 0.0)

        # ---- stage the h1 window; zero out-of-image halo rows ------------
        hp_ref[:, F:F + L1] = h1.astype(hp_ref.dtype)

        @pl.when(rb == 0)
        def _():
            hp_ref[:, F:F + W] = jnp.zeros((C, W), hp_ref.dtype)

        @pl.when(rb == NRB - 1)
        def _():
            hp_ref[:, F + (th + 1) * W:F + L1] = jnp.zeros((C, W), hp_ref.dtype)

        # ---- conv2 + folded BN2 + identity shortcut + ReLU ----------------
        def h_patch(kh, kw):
            s = F + kh * W + kw - 1                       # static offset
            return hp_ref[:, s:s + L2]

        build_im2col(h_patch, L2)
        out = jnp.dot(w2_ref[...], col_ref[:, :L2],
                      preferred_element_type=jnp.float32)
        xres = xp_ref[:, F + 2 * W:F + 2 * W + L2]        # residual in f32
        out = jnp.maximum(out + b2_ref[...] + xres, 0.0)
        o_ref[0] = out.astype(o_ref.dtype)

    return kernel, PADX, PADH


def basic_block_forward(x_nchw, params, eps=1e-5):
    """x_nchw: (N, C, H, W) float32.  Returns (N, C, H, W) float32."""
    (w1, g1, be1, m1, v1, w2, g2, be2, m2, v2) = params
    N, Cin, H, W = x_nchw.shape
    Cout = w1.shape[0]
    assert Cin == Cout, "identity shortcut requires in_channel == out_channel"
    C = Cin
    HW = H * W

    th = _pick_tile_rows(H, W)
    NRB = H // th
    L1 = (th + 2) * W
    LP = (H + 4) * W

    # Fold eval-mode BatchNorm: scale into the weights, bias kept separate.
    s1 = g1 / jnp.sqrt(v1 + eps)
    b1 = (be1 - m1 * s1).reshape(C, 1).astype(jnp.float32)
    s2 = g2 / jnp.sqrt(v2 + eps)
    b2 = (be2 - m2 * s2).reshape(C, 1).astype(jnp.float32)

    # (Cout, Cin, 3, 3) -> tap-fused (Cout, 9*Cin) bf16, column = (kh*3+kw)*Cin + ci
    w1f = jnp.transpose(w1 * s1[:, None, None, None],
                        (0, 2, 3, 1)).reshape(C, 9 * C).astype(jnp.bfloat16)
    w2f = jnp.transpose(w2 * s2[:, None, None, None],
                        (0, 2, 3, 1)).reshape(C, 9 * C).astype(jnp.bfloat16)

    # NCHW -> (N, C, H*W) with 2 zero rows top/bottom (vertical 'SAME' padding
    # plus the conv1 halo of every row tile).
    xflat = x_nchw.astype(jnp.float32).reshape(N, C, HW)
    xpad = jnp.pad(xflat, ((0, 0), (0, 0), (2 * W, 2 * W)))

    # Horizontal boundary masks (1.0 = valid output lane), built once here.
    col = jnp.arange(L1, dtype=jnp.int32) % W
    masks = jnp.stack([col != 0, col != W - 1]).astype(jnp.float32)

    kernel, PADX, PADH = _make_kernel(H, W, C, th)

    out = pl.pallas_call(
        kernel,
        out_shape=jax.ShapeDtypeStruct((N, C, HW), jnp.float32),
        grid_spec=pltpu.PrefetchScalarGridSpec(
            num_scalar_prefetch=0,
            grid=(N, NRB),
            in_specs=[
                pl.BlockSpec((1, C, LP), lambda n, rb: (n, 0, 0)),
                # Constant-index weight/bias/mask inputs (fetched once).
                pl.BlockSpec((C, 9 * C), lambda n, rb: (0, 0)),
                pl.BlockSpec((C, 1), lambda n, rb: (0, 0)),
                pl.BlockSpec((C, 9 * C), lambda n, rb: (0, 0)),
                pl.BlockSpec((C, 1), lambda n, rb: (0, 0)),
                pl.BlockSpec((2, L1), lambda n, rb: (0, 0)),
            ],
            out_specs=pl.BlockSpec((1, C, th * W), lambda n, rb: (n, 0, rb)),
            scratch_shapes=[
                pltpu.VMEM((C, PADX), jnp.float32),
                pltpu.VMEM((C, PADH), jnp.bfloat16),
                pltpu.VMEM((9 * C, L1), jnp.bfloat16),
            ],
        ),
        compiler_params=pltpu.CompilerParams(
            dimension_semantics=("parallel", "parallel"),
            vmem_limit_bytes=32 * 1024 * 1024,
        ),
    )(xpad, w1f, b1, w2f, b2, masks)

    return out.reshape(N, C, H, W)


def ref_forward(x_nchw, params, eps=1e-5):
    """Pure-JAX reference with the same bf16-input / f32-accumulate convolutions."""
    (w1, g1, be1, m1, v1, w2, g2, be2, m2, v2) = params
    s1 = g1 / jnp.sqrt(v1 + eps)
    b1 = be1 - m1 * s1
    s2 = g2 / jnp.sqrt(v2 + eps)
    b2 = be2 - m2 * s2
    x = jnp.transpose(x_nchw, (0, 2, 3, 1)).astype(jnp.float32)   # NHWC
    dn = ("NHWC", "HWIO", "NHWC")

    def r(v):   # round through bf16 (exactly what the kernel feeds the MXU)
        return v.astype(jnp.bfloat16).astype(jnp.float32)

    w1k = r(jnp.transpose(w1 * s1[:, None, None, None], (2, 3, 1, 0)))
    w2k = r(jnp.transpose(w2 * s2[:, None, None, None], (2, 3, 1, 0)))
    h = jax.lax.conv_general_dilated(r(x), w1k, (1, 1), "SAME",
                                     dimension_numbers=dn,
                                     precision=jax.lax.Precision.HIGHEST)
    h = jnp.maximum(h + b1, 0.0)
    h = jax.lax.conv_general_dilated(r(h), w2k, (1, 1), "SAME",
                                     dimension_numbers=dn,
                                     precision=jax.lax.Precision.HIGHEST)
    h = jnp.maximum(h + b2 + x, 0.0)
    return jnp.transpose(h, (0, 3, 1, 2))


if __name__ == "__main__":
    # BasicBlock(in_channel=4, out_channel=4), eval-mode BN.
    N, C, H, W = 2, 4, 16, 16
    key = jax.random.PRNGKey(0)
    ks = jax.random.split(key, 10)

    x = jax.random.normal(ks[0], (N, C, H, W), jnp.float32)

    # conv weights: PyTorch layout (Cout, Cin, 3, 3), no bias.
    w1 = jax.random.normal(ks[1], (C, C, 3, 3), jnp.float32) * 0.1
    w2 = jax.random.normal(ks[2], (C, C, 3, 3), jnp.float32) * 0.1
    # BatchNorm parameters (gamma, beta, running_mean, running_var).
    g1 = 1.0 + 0.1 * jax.random.normal(ks[3], (C,), jnp.float32)
    be1 = 0.1 * jax.random.normal(ks[4], (C,), jnp.float32)
    m1 = 0.1 * jax.random.normal(ks[5], (C,), jnp.float32)
    v1 = 1.0 + 0.1 * jnp.abs(jax.random.normal(ks[6], (C,), jnp.float32))
    g2 = 1.0 + 0.1 * jax.random.normal(ks[7], (C,), jnp.float32)
    be2 = 0.1 * jax.random.normal(ks[8], (C,), jnp.float32)
    m2 = jnp.zeros((C,), jnp.float32)
    v2 = jnp.ones((C,), jnp.float32)
    params = (w1, g1, be1, m1, v1, w2, g2, be2, m2, v2)

    out = jax.block_until_ready(basic_block_forward(x, params))
    ref = jax.block_until_ready(ref_forward(x, params))
    assert out.shape == (N, C, H, W)
    assert jnp.allclose(out, ref, atol=1e-3, rtol=1e-3), (
        "mismatch vs reference, max abs diff = %r"
        % float(jnp.max(jnp.abs(out - ref))))

    # Second shape: taller image -> interior row tiles (no image-boundary rows).
    x2 = jax.random.normal(ks[9], (1, C, 32, 16), jnp.float32)
    out2 = jax.block_until_ready(basic_block_forward(x2, params))
    ref2 = jax.block_until_ready(ref_forward(x2, params))
    assert jnp.allclose(out2, ref2, atol=1e-3, rtol=1e-3), (
        "mismatch vs reference (tall image), max abs diff = %r"
        % float(jnp.max(jnp.abs(out2 - ref2))))

    print("KERNEL_OK")
</pallas_src>

<mosaic_0001>
module attributes {stable_mosaic.version = 11 : i64} {
  func.func @kernel(%arg0: i32, %arg1: i32, %arg2: memref<1x4x320xf32, #tpu.memory_space<vmem>>, %arg3: memref<4x36xbf16, #tpu.memory_space<vmem>>, %arg4: memref<4x1xf32, #tpu.memory_space<vmem>>, %arg5: memref<4x36xbf16, #tpu.memory_space<vmem>>, %arg6: memref<4x1xf32, #tpu.memory_space<vmem>>, %arg7: memref<2x160xf32, #tpu.memory_space<vmem>>, %arg8: memref<1x4x128xf32, #tpu.memory_space<vmem>>, %arg9: memref<4x448xf32, #tpu.memory_space<vmem>>, %arg10: memref<4x416xbf16, #tpu.memory_space<vmem>>, %arg11: memref<36x160xbf16, #tpu.memory_space<vmem>>) attributes {dimension_semantics = [#tpu.dimension_semantics<parallel>, #tpu.dimension_semantics<parallel>], iteration_bounds = array<i64: 2, 2>, scalar_prefetch = 0 : i64, scratch_operands = 3 : i64, tpu.core_type = #tpu.core_type<tc>, window_params = [{transform_indices = @transform_0, window_bounds = array<i64: 1, 4, 320>}, {pipeline_mode = #tpu.pipeline_mode<synchronous>, transform_indices = @transform_1, window_bounds = array<i64: 4, 36>}, {pipeline_mode = #tpu.pipeline_mode<synchronous>, transform_indices = @transform_2, window_bounds = array<i64: 4, 1>}, {pipeline_mode = #tpu.pipeline_mode<synchronous>, transform_indices = @transform_3, window_bounds = array<i64: 4, 36>}, {pipeline_mode = #tpu.pipeline_mode<synchronous>, transform_indices = @transform_4, window_bounds = array<i64: 4, 1>}, {pipeline_mode = #tpu.pipeline_mode<synchronous>, transform_indices = @transform_5, window_bounds = array<i64: 2, 160>}, {transform_indices = @transform_6, window_bounds = array<i64: 1, 4, 128>}]} {
    %c0 = arith.constant 0 : index
    %c0_0 = arith.constant 0 : index
    %0 = vector.load %arg7[%c0, %c0_0] : memref<2x160xf32, #tpu.memory_space<vmem>>, vector<1x160xf32>
    %cst = arith.constant 5.000000e-01 : f32
    %1 = vector.broadcast %cst : f32 to vector<1x160xf32>
    %2 = arith.cmpf ogt, %0, %1 : vector<1x160xf32>
    %c1 = arith.constant 1 : index
    %c0_1 = arith.constant 0 : index
    %3 = vector.load %arg7[%c1, %c0_1] : memref<2x160xf32, #tpu.memory_space<vmem>>, vector<1x160xf32>
    %cst_2 = arith.constant 5.000000e-01 : f32
    %4 = vector.broadcast %cst_2 : f32 to vector<1x160xf32>
    %5 = arith.cmpf ogt, %3, %4 : vector<1x160xf32>
    %c128_i32 = arith.constant 128 : i32
    %6 = arith.muli %arg1, %c128_i32 : i32
    %7 = tpu.assume_multiple %6, 128 : i32
    %c0_3 = arith.constant 0 : index
    %c0_4 = arith.constant 0 : index
    %8 = arith.index_cast %7 : i32 to index
    %9 = vector.load %arg2[%c0_3, %c0_4, %8] : memref<1x4x320xf32, #tpu.memory_space<vmem>>, vector<1x4x192xf32>
    %10 = vector.shape_cast %9 : vector<1x4x192xf32> to vector<4x192xf32>
    %c0_5 = arith.constant 0 : index
    %c128 = arith.constant 128 : index
    %11 = vector.load %arg9[%c0_5, %c128] : memref<4x448xf32, #tpu.memory_space<vmem>>, vector<4x192xf32>
    tpu.vector_store %arg9[%c0_5, %c128], %10 {strides = array<i32>} : memref<4x448xf32, #tpu.memory_space<vmem>>, vector<4x192xf32>,
    %c0_6 = arith.constant 0 : index
    %c127 = arith.constant 127 : index
    %12 = vector.load %arg9[%c0_6, %c127] : memref<4x448xf32, #tpu.memory_space<vmem>>, vector<4x160xf32>
    %c0_i32 = arith.constant 0 : i32
    %13 = arith.sitofp %c0_i32 : i32 to f32
    %14 = vector.shape_cast %2 : vector<1x160xi1> to vector<1x160xi1>
    %15 = vector.broadcast %14 : vector<1x160xi1> to vector<4x160xi1>
    %16 = vector.broadcast %13 : f32 to vector<4x160xf32>
    %17 = arith.select %15, %12, %16 : vector<4x160xi1>, vector<4x160xf32>
    %18 = arith.truncf %17 : vector<4x160xf32> to vector<4x160xbf16>
    %c0_7 = arith.constant 0 : index
    %c0_8 = arith.constant 0 : index
    %19 = vector.load %arg11[%c0_7, %c0_8] : memref<36x160xbf16, #tpu.memory_space<vmem>>, vector<4x160xbf16>
    tpu.vector_store %arg11[%c0_7, %c0_8], %18 {strides = array<i32>} : memref<36x160xbf16, #tpu.memory_space<vmem>>, vector<4x160xbf16>,
    %c0_9 = arith.constant 0 : index
    %c128_10 = arith.constant 128 : index
    %20 = vector.load %arg9[%c0_9, %c128_10] : memref<4x448xf32, #tpu.memory_space<vmem>>, vector<4x160xf32>
    %21 = arith.truncf %20 : vector<4x160xf32> to vector<4x160xbf16>
    %c4 = arith.constant 4 : index
    %c0_11 = arith.constant 0 : index
    %22 = vector.load %arg11[%c4, %c0_11] : memref<36x160xbf16, #tpu.memory_space<vmem>>, vector<4x160xbf16>
    tpu.vector_store %arg11[%c4, %c0_11], %21 {strides = array<i32>} : memref<36x160xbf16, #tpu.memory_space<vmem>>, vector<4x160xbf16>,
    %c0_12 = arith.constant 0 : index
    %c129 = arith.constant 129 : index
    %23 = vector.load %arg9[%c0_12, %c129] : memref<4x448xf32, #tpu.memory_space<vmem>>, vector<4x160xf32>
    %c0_i32_13 = arith.constant 0 : i32
    %24 = arith.sitofp %c0_i32_13 : i32 to f32
    %25 = vector.shape_cast %5 : vector<1x160xi1> to vector<1x160xi1>
    %26 = vector.broadcast %25 : vector<1x160xi1> to vector<4x160xi1>
    %27 = vector.broadcast %24 : f32 to vector<4x160xf32>
    %28 = arith.select %26, %23, %27 : vector<4x160xi1>, vector<4x160xf32>
    %29 = arith.truncf %28 : vector<4x160xf32> to vector<4x160xbf16>
    %c8 = arith.constant 8 : index
    %c0_14 = arith.constant 0 : index
    %30 = vector.load %arg11[%c8, %c0_14] : memref<36x160xbf16, #tpu.memory_space<vmem>>, vector<4x160xbf16>
    tpu.vector_store %arg11[%c8, %c0_14], %29 {strides = array<i32>} : memref<36x160xbf16, #tpu.memory_space<vmem>>, vector<4x160xbf16>,
    %c0_15 = arith.constant 0 : index
    %c143 = arith.constant 143 : index
    %31 = vector.load %arg9[%c0_15, %c143] : memref<4x448xf32, #tpu.memory_space<vmem>>, vector<4x160xf32>
    %c0_i32_16 = arith.constant 0 : i32
    %32 = arith.sitofp %c0_i32_16 : i32 to f32
    %33 = vector.shape_cast %2 : vector<1x160xi1> to vector<1x160xi1>
    %34 = vector.broadcast %33 : vector<1x160xi1> to vector<4x160xi1>
    %35 = vector.broadcast %32 : f32 to vector<4x160xf32>
    %36 = arith.select %34, %31, %35 : vector<4x160xi1>, vector<4x160xf32>
    %37 = arith.truncf %36 : vector<4x160xf32> to vector<4x160xbf16>
    %c12 = arith.constant 12 : index
    %c0_17 = arith.constant 0 : index
    %38 = vector.load %arg11[%c12, %c0_17] : memref<36x160xbf16, #tpu.memory_space<vmem>>, vector<4x160xbf16>
    tpu.vector_store %arg11[%c12, %c0_17], %37 {strides = array<i32>} : memref<36x160xbf16, #tpu.memory_space<vmem>>, vector<4x160xbf16>,
    %c0_18 = arith.constant 0 : index
    %c144 = arith.constant 144 : index
    %39 = vector.load %arg9[%c0_18, %c144] : memref<4x448xf32, #tpu.memory_space<vmem>>, vector<4x160xf32>
    %40 = arith.truncf %39 : vector<4x160xf32> to vector<4x160xbf16>
    %c16 = arith.constant 16 : index
    %c0_19 = arith.constant 0 : index
    %41 = vector.load %arg11[%c16, %c0_19] : memref<36x160xbf16, #tpu.memory_space<vmem>>, vector<4x160xbf16>
    tpu.vector_store %arg11[%c16, %c0_19], %40 {strides = array<i32>} : memref<36x160xbf16, #tpu.memory_space<vmem>>, vector<4x160xbf16>,
    %c0_20 = arith.constant 0 : index
    %c145 = arith.constant 145 : index
    %42 = vector.load %arg9[%c0_20, %c145] : memref<4x448xf32, #tpu.memory_space<vmem>>, vector<4x160xf32>
    %c0_i32_21 = arith.constant 0 : i32
    %43 = arith.sitofp %c0_i32_21 : i32 to f32
    %44 = vector.shape_cast %5 : vector<1x160xi1> to vector<1x160xi1>
    %45 = vector.broadcast %44 : vector<1x160xi1> to vector<4x160xi1>
    %46 = vector.broadcast %43 : f32 to vector<4x160xf32>
    %47 = arith.select %45, %42, %46 : vector<4x160xi1>, vector<4x160xf32>
    %48 = arith.truncf %47 : vector<4x160xf32> to vector<4x160xbf16>
    %c20 = arith.constant 20 : index
    %c0_22 = arith.constant 0 : index
    %49 = vector.load %arg11[%c20, %c0_22] : memref<36x160xbf16, #tpu.memory_space<vmem>>, vector<4x160xbf16>
    tpu.vector_store %arg11[%c20, %c0_22], %48 {strides = array<i32>} : memref<36x160xbf16, #tpu.memory_space<vmem>>, vector<4x160xbf16>,
    %c0_23 = arith.constant 0 : index
    %c159 = arith.constant 159 : index
    %50 = vector.load %arg9[%c0_23, %c159] : memref<4x448xf32, #tpu.memory_space<vmem>>, vector<4x160xf32>
    %c0_i32_24 = arith.constant 0 : i32
    %51 = arith.sitofp %c0_i32_24 : i32 to f32
    %52 = vector.shape_cast %2 : vector<1x160xi1> to vector<1x160xi1>
    %53 = vector.broadcast %52 : vector<1x160xi1> to vector<4x160xi1>
    %54 = vector.broadcast %51 : f32 to vector<4x160xf32>
    %55 = arith.select %53, %50, %54 : vector<4x160xi1>, vector<4x160xf32>
    %56 = arith.truncf %55 : vector<4x160xf32> to vector<4x160xbf16>
    %c24 = arith.constant 24 : index
    %c0_25 = arith.constant 0 : index
    %57 = vector.load %arg11[%c24, %c0_25] : memref<36x160xbf16, #tpu.memory_space<vmem>>, vector<4x160xbf16>
    tpu.vector_store %arg11[%c24, %c0_25], %56 {strides = array<i32>} : memref<36x160xbf16, #tpu.memory_space<vmem>>, vector<4x160xbf16>,
    %c0_26 = arith.constant 0 : index
    %c160 = arith.constant 160 : index
    %58 = vector.load %arg9[%c0_26, %c160] : memref<4x448xf32, #tpu.memory_space<vmem>>, vector<4x160xf32>
    %59 = arith.truncf %58 : vector<4x160xf32> to vector<4x160xbf16>
    %c28 = arith.constant 28 : index
    %c0_27 = arith.constant 0 : index
    %60 = vector.load %arg11[%c28, %c0_27] : memref<36x160xbf16, #tpu.memory_space<vmem>>, vector<4x160xbf16>
    tpu.vector_store %arg11[%c28, %c0_27], %59 {strides = array<i32>} : memref<36x160xbf16, #tpu.memory_space<vmem>>, vector<4x160xbf16>,
    %c0_28 = arith.constant 0 : index
    %c161 = arith.constant 161 : index
    %61 = vector.load %arg9[%c0_28, %c161] : memref<4x448xf32, #tpu.memory_space<vmem>>, vector<4x160xf32>
    %c0_i32_29 = arith.constant 0 : i32
    %62 = arith.sitofp %c0_i32_29 : i32 to f32
    %63 = vector.shape_cast %5 : vector<1x160xi1> to vector<1x160xi1>
    %64 = vector.broadcast %63 : vector<1x160xi1> to vector<4x160xi1>
    %65 = vector.broadcast %62 : f32 to vector<4x160xf32>
    %66 = arith.select %64, %61, %65 : vector<4x160xi1>, vector<4x160xf32>
    %67 = arith.truncf %66 : vector<4x160xf32> to vector<4x160xbf16>
    %c32 = arith.constant 32 : index
    %c0_30 = arith.constant 0 : index
    %68 = vector.load %arg11[%c32, %c0_30] : memref<36x160xbf16, #tpu.memory_space<vmem>>, vector<4x160xbf16>
    tpu.vector_store %arg11[%c32, %c0_30], %67 {strides = array<i32>} : memref<36x160xbf16, #tpu.memory_space<vmem>>, vector<4x160xbf16>,
    %c0_31 = arith.constant 0 : index
    %c0_32 = arith.constant 0 : index
    %69 = vector.load %arg3[%c0_31, %c0_32] : memref<4x36xbf16, #tpu.memory_space<vmem>>, vector<4x36xbf16>
    %c0_33 = arith.constant 0 : index
    %c0_34 = arith.constant 0 : index
    %70 = vector.load %arg11[%c0_33, %c0_34] : memref<36x160xbf16, #tpu.memory_space<vmem>>, vector<36x160xbf16>
    %cst_35 = arith.constant dense<0.000000e+00> : vector<4x160xf32>
    %71 = tpu.matmul %69, %70, %cst_35 {dimension_numbers = #tpu.dot_dimension_numbers<[1], [0], [0], [1], [0, 0, 1, 1], [], []>} : vector<4x36xbf16>, vector<36x160xbf16>, vector<4x160xf32> -> vector<4x160xf32>
    %c0_36 = arith.constant 0 : index
    %c0_37 = arith.constant 0 : index
    %72 = vector.load %arg4[%c0_36, %c0_37] : memref<4x1xf32, #tpu.memory_space<vmem>>, vector<4x1xf32>
    %73 = vector.broadcast %72 : vector<4x1xf32> to vector<4x160xf32>
    %74 = arith.addf %71, %73 : vector<4x160xf32>
    %cst_38 = arith.constant 0.000000e+00 : f32
    %75 = vector.broadcast %cst_38 : f32 to vector<4x160xf32>
    %76 = arith.maximumf %74, %75 : vector<4x160xf32>
    %77 = arith.truncf %76 : vector<4x160xf32> to vector<4x160xbf16>
    %c0_39 = arith.constant 0 : index
    %c128_40 = arith.constant 128 : index
    %78 = vector.load %arg10[%c0_39, %c128_40] : memref<4x416xbf16, #tpu.memory_space<vmem>>, vector<4x160xbf16>
    tpu.vector_store %arg10[%c0_39, %c128_40], %77 {strides = array<i32>} : memref<4x416xbf16, #tpu.memory_space<vmem>>, vector<4x160xbf16>,
    %c0_i32_41 = arith.constant 0 : i32
    %79 = arith.cmpi eq, %arg1, %c0_i32_41 : i32
    %80 = arith.extui %79 : i1 to i32
    %c0_i32_42 = arith.constant 0 : i32
    %81 = arith.cmpi ne, %80, %c0_i32_42 : i32
    scf.if %81 {
      %cst_99 = arith.constant 0.000000e+00 : bf16
      %152 = vector.broadcast %cst_99 : bf16 to vector<4x16xbf16>
      %c0_100 = arith.constant 0 : index
      %c128_101 = arith.constant 128 : index
      %153 = vector.load %arg10[%c0_100, %c128_101] : memref<4x416xbf16, #tpu.memory_space<vmem>>, vector<4x16xbf16>
      tpu.vector_store %arg10[%c0_100, %c128_101], %152 {strides = array<i32>} : memref<4x416xbf16, #tpu.memory_space<vmem>>, vector<4x16xbf16>,
    } else {
    }
    %c1_i32 = arith.constant 1 : i32
    %82 = arith.cmpi eq, %arg1, %c1_i32 : i32
    %83 = arith.extui %82 : i1 to i32
    %c0_i32_43 = arith.constant 0 : i32
    %84 = arith.cmpi ne, %83, %c0_i32_43 : i32
    scf.if %84 {
      %cst_99 = arith.constant 0.000000e+00 : bf16
      %152 = vector.broadcast %cst_99 : bf16 to vector<4x16xbf16>
      %c0_100 = arith.constant 0 : index
      %c272 = arith.constant 272 : index
      %153 = vector.load %arg10[%c0_100, %c272] : memref<4x416xbf16, #tpu.memory_space<vmem>>, vector<4x16xbf16>
      tpu.vector_store %arg10[%c0_100, %c272], %152 {strides = array<i32>} : memref<4x416xbf16, #tpu.memory_space<vmem>>, vector<4x16xbf16>,
    } else {
    }
    %c0_44 = arith.constant 0 : index
    %c127_45 = arith.constant 127 : index
    %85 = vector.load %arg10[%c0_44, %c127_45] : memref<4x416xbf16, #tpu.memory_space<vmem>>, vector<4x128xbf16>
    %86 = vector.extract_strided_slice %2 {offsets = [0, 0], sizes = [1, 128], strides = [1, 1]} : vector<1x160xi1> to vector<1x128xi1>
    %c0_i32_46 = arith.constant 0 : i32
    %87 = arith.sitofp %c0_i32_46 : i32 to bf16
    %88 = vector.shape_cast %86 : vector<1x128xi1> to vector<1x128xi1>
    %89 = vector.broadcast %88 : vector<1x128xi1> to vector<4x128xi1>
    %90 = vector.broadcast %87 : bf16 to vector<4x128xbf16>
    %91 = arith.select %89, %85, %90 : vector<4x128xi1>, vector<4x128xbf16>
    %c0_47 = arith.constant 0 : index
    %c0_48 = arith.constant 0 : index
    %92 = vector.load %arg11[%c0_47, %c0_48] : memref<36x160xbf16, #tpu.memory_space<vmem>>, vector<4x128xbf16>
    tpu.vector_store %arg11[%c0_47, %c0_48], %91 {strides = array<i32>} : memref<36x160xbf16, #tpu.memory_space<vmem>>, vector<4x128xbf16>,
    %c0_49 = arith.constant 0 : index
    %c128_50 = arith.constant 128 : index
    %93 = vector.load %arg10[%c0_49, %c128_50] : memref<4x416xbf16, #tpu.memory_space<vmem>>, vector<4x128xbf16>
    %c4_51 = arith.constant 4 : index
    %c0_52 = arith.constant 0 : index
    %94 = vector.load %arg11[%c4_51, %c0_52] : memref<36x160xbf16, #tpu.memory_space<vmem>>, vector<4x128xbf16>
    tpu.vector_store %arg11[%c4_51, %c0_52], %93 {strides = array<i32>} : memref<36x160xbf16, #tpu.memory_space<vmem>>, vector<4x128xbf16>,
    %c0_53 = arith.constant 0 : index
    %c129_54 = arith.constant 129 : index
    %95 = vector.load %arg10[%c0_53, %c129_54] : memref<4x416xbf16, #tpu.memory_space<vmem>>, vector<4x128xbf16>
    %96 = vector.extract_strided_slice %5 {offsets = [0, 0], sizes = [1, 128], strides = [1, 1]} : vector<1x160xi1> to vector<1x128xi1>
    %c0_i32_55 = arith.constant 0 : i32
    %97 = arith.sitofp %c0_i32_55 : i32 to bf16
    %98 = vector.shape_cast %96 : vector<1x128xi1> to vector<1x128xi1>
    %99 = vector.broadcast %98 : vector<1x128xi1> to vector<4x128xi1>
    %100 = vector.broadcast %97 : bf16 to vector<4x128xbf16>
    %101 = arith.select %99, %95, %100 : vector<4x128xi1>, vector<4x128xbf16>
    %c8_56 = arith.constant 8 : index
    %c0_57 = arith.constant 0 : index
    %102 = vector.load %arg11[%c8_56, %c0_57] : memref<36x160xbf16, #tpu.memory_space<vmem>>, vector<4x128xbf16>
    tpu.vector_store %arg11[%c8_56, %c0_57], %101 {strides = array<i32>} : memref<36x160xbf16, #tpu.memory_space<vmem>>, vector<4x128xbf16>,
    %c0_58 = arith.constant 0 : index
    %c143_59 = arith.constant 143 : index
    %103 = vector.load %arg10[%c0_58, %c143_59] : memref<4x416xbf16, #tpu.memory_space<vmem>>, vector<4x128xbf16>
    %104 = vector.extract_strided_slice %2 {offsets = [0, 0], sizes = [1, 128], strides = [1, 1]} : vector<1x160xi1> to vector<1x128xi1>
    %c0_i32_60 = arith.constant 0 : i32
    %105 = arith.sitofp %c0_i32_60 : i32 to bf16
    %106 = vector.shape_cast %104 : vector<1x128xi1> to vector<1x128xi1>
    %107 = vector.broadcast %106 : vector<1x128xi1> to vector<4x128xi1>
    %108 = vector.broadcast %105 : bf16 to vector<4x128xbf16>
    %109 = arith.select %107, %103, %108 : vector<4x128xi1>, vector<4x128xbf16>
    %c12_61 = arith.constant 12 : index
    %c0_62 = arith.constant 0 : index
    %110 = vector.load %arg11[%c12_61, %c0_62] : memref<36x160xbf16, #tpu.memory_space<vmem>>, vector<4x128xbf16>
    tpu.vector_store %arg11[%c12_61, %c0_62], %109 {strides = array<i32>} : memref<36x160xbf16, #tpu.memory_space<vmem>>, vector<4x128xbf16>,
    %c0_63 = arith.constant 0 : index
    %c144_64 = arith.constant 144 : index
    %111 = vector.load %arg10[%c0_63, %c144_64] : memref<4x416xbf16, #tpu.memory_space<vmem>>, vector<4x128xbf16>
    %c16_65 = arith.constant 16 : index
    %c0_66 = arith.constant 0 : index
    %112 = vector.load %arg11[%c16_65, %c0_66] : memref<36x160xbf16, #tpu.memory_space<vmem>>, vector<4x128xbf16>
    tpu.vector_store %arg11[%c16_65, %c0_66], %111 {strides = array<i32>} : memref<36x160xbf16, #tpu.memory_space<vmem>>, vector<4x128xbf16>,
    %c0_67 = arith.constant 0 : index
    %c145_68 = arith.constant 145 : index
    %113 = vector.load %arg10[%c0_67, %c145_68] : memref<4x416xbf16, #tpu.memory_space<vmem>>, vector<4x128xbf16>
    %114 = vector.extract_strided_slice %5 {offsets = [0, 0], sizes = [1, 128], strides = [1, 1]} : vector<1x160xi1> to vector<1x128xi1>
    %c0_i32_69 = arith.constant 0 : i32
    %115 = arith.sitofp %c0_i32_69 : i32 to bf16
    %116 = vector.shape_cast %114 : vector<1x128xi1> to vector<1x128xi1>
    %117 = vector.broadcast %116 : vector<1x128xi1> to vector<4x128xi1>
    %118 = vector.broadcast %115 : bf16 to vector<4x128xbf16>
    %119 = arith.select %117, %113, %118 : vector<4x128xi1>, vector<4x128xbf16>
    %c20_70 = arith.constant 20 : index
    %c0_71 = arith.constant 0 : index
    %120 = vector.load %arg11[%c20_70, %c0_71] : memref<36x160xbf16, #tpu.memory_space<vmem>>, vector<4x128xbf16>
    tpu.vector_store %arg11[%c20_70, %c0_71], %119 {strides = array<i32>} : memref<36x160xbf16, #tpu.memory_space<vmem>>, vector<4x128xbf16>,
    %c0_72 = arith.constant 0 : index
    %c159_73 = arith.constant 159 : index
    %121 = vector.load %arg10[%c0_72, %c159_73] : memref<4x416xbf16, #tpu.memory_space<vmem>>, vector<4x128xbf16>
    %122 = vector.extract_strided_slice %2 {offsets = [0, 0], sizes = [1, 128], strides = [1, 1]} : vector<1x160xi1> to vector<1x128xi1>
    %c0_i32_74 = arith.constant 0 : i32
    %123 = arith.sitofp %c0_i32_74 : i32 to bf16
    %124 = vector.shape_cast %122 : vector<1x128xi1> to vector<1x128xi1>
    %125 = vector.broadcast %124 : vector<1x128xi1> to vector<4x128xi1>
    %126 = vector.broadcast %123 : bf16 to vector<4x128xbf16>
    %127 = arith.select %125, %121, %126 : vector<4x128xi1>, vector<4x128xbf16>
    %c24_75 = arith.constant 24 : index
    %c0_76 = arith.constant 0 : index
    %128 = vector.load %arg11[%c24_75, %c0_76] : memref<36x160xbf16, #tpu.memory_space<vmem>>, vector<4x128xbf16>
    tpu.vector_store %arg11[%c24_75, %c0_76], %127 {strides = array<i32>} : memref<36x160xbf16, #tpu.memory_space<vmem>>, vector<4x128xbf16>,
    %c0_77 = arith.constant 0 : index
    %c160_78 = arith.constant 160 : index
    %129 = vector.load %arg10[%c0_77, %c160_78] : memref<4x416xbf16, #tpu.memory_space<vmem>>, vector<4x128xbf16>
    %c28_79 = arith.constant 28 : index
    %c0_80 = arith.constant 0 : index
    %130 = vector.load %arg11[%c28_79, %c0_80] : memref<36x160xbf16, #tpu.memory_space<vmem>>, vector<4x128xbf16>
    tpu.vector_store %arg11[%c28_79, %c0_80], %129 {strides = array<i32>} : memref<36x160xbf16, #tpu.memory_space<vmem>>, vector<4x128xbf16>,
    %c0_81 = arith.constant 0 : index
    %c161_82 = arith.constant 161 : index
    %131 = vector.load %arg10[%c0_81, %c161_82] : memref<4x416xbf16, #tpu.memory_space<vmem>>, vector<4x128xbf16>
    %132 = vector.extract_strided_slice %5 {offsets = [0, 0], sizes = [1, 128], strides = [1, 1]} : vector<1x160xi1> to vector<1x128xi1>
    %c0_i32_83 = arith.constant 0 : i32
    %133 = arith.sitofp %c0_i32_83 : i32 to bf16
    %134 = vector.shape_cast %132 : vector<1x128xi1> to vector<1x128xi1>
    %135 = vector.broadcast %134 : vector<1x128xi1> to vector<4x128xi1>
    %136 = vector.broadcast %133 : bf16 to vector<4x128xbf16>
    %137 = arith.select %135, %131, %136 : vector<4x128xi1>, vector<4x128xbf16>
    %c32_84 = arith.constant 32 : index
    %c0_85 = arith.constant 0 : index
    %138 = vector.load %arg11[%c32_84, %c0_85] : memref<36x160xbf16, #tpu.memory_space<vmem>>, vector<4x128xbf16>
    tpu.vector_store %arg11[%c32_84, %c0_85], %137 {strides = array<i32>} : memref<36x160xbf16, #tpu.memory_space<vmem>>, vector<4x128xbf16>,
    %c0_86 = arith.constant 0 : index
    %c0_87 = arith.constant 0 : index
    %139 = vector.load %arg5[%c0_86, %c0_87] : memref<4x36xbf16, #tpu.memory_space<vmem>>, vector<4x36xbf16>
    %c0_88 = arith.constant 0 : index
    %c0_89 = arith.constant 0 : index
    %140 = vector.load %arg11[%c0_88, %c0_89] : memref<36x160xbf16, #tpu.memory_space<vmem>>, vector<36x128xbf16>
    %cst_90 = arith.constant dense<0.000000e+00> : vector<4x128xf32>
    %141 = tpu.matmul %139, %140, %cst_90 {dimension_numbers = #tpu.dot_dimension_numbers<[1], [0], [0], [1], [0, 0, 1, 1], [], []>} : vector<4x36xbf16>, vector<36x128xbf16>, vector<4x128xf32> -> vector<4x128xf32>
    %c0_91 = arith.constant 0 : index
    %c160_92 = arith.constant 160 : index
    %142 = vector.load %arg9[%c0_91, %c160_92] : memref<4x448xf32, #tpu.memory_space<vmem>>, vector<4x128xf32>
    %c0_93 = arith.constant 0 : index
    %c0_94 = arith.constant 0 : index
    %143 = vector.load %arg6[%c0_93, %c0_94] : memref<4x1xf32, #tpu.memory_space<vmem>>, vector<4x1xf32>
    %144 = vector.broadcast %143 : vector<4x1xf32> to vector<4x128xf32>
    %145 = arith.addf %141, %144 : vector<4x128xf32>
    %146 = arith.addf %145, %142 : vector<4x128xf32>
    %cst_95 = arith.constant 0.000000e+00 : f32
    %147 = vector.broadcast %cst_95 : f32 to vector<4x128xf32>
    %148 = arith.maximumf %146, %147 : vector<4x128xf32>
    %c0_96 = arith.constant 0 : index
    %c0_97 = arith.constant 0 : index
    %c0_98 = arith.constant 0 : index
    %149 = vector.load %arg8[%c0_96, %c0_97, %c0_98] : memref<1x4x128xf32, #tpu.memory_space<vmem>>, vector<1x4x128xf32>
    %150 = vector.shape_cast %149 : vector<1x4x128xf32> to vector<4x128xf32>
    %151 = vector.shape_cast %148 : vector<4x128xf32> to vector<1x4x128xf32>
    tpu.vector_store %arg8[%c0_96, %c0_97, %c0_98], %151 {strides = array<i32>} : memref<1x4x128xf32, #tpu.memory_space<vmem>>, vector<1x4x128xf32>,
    return
  }
  func.func @transform_0(%arg0: i32, %arg1: i32) -> (i32, i32, i32) {
    %c0_i32 = arith.constant 0 : i32
    %c0_i32_0 = arith.constant 0 : i32
    %c0_i32_1 = arith.constant 0 : i32
    return %arg0, %c0_i32, %c0_i32_0 : i32, i32, i32
  }
  func.func @transform_1(%arg0: i32, %arg1: i32) -> (i32, i32) {
    %c0_i32 = arith.constant 0 : i32
    %c0_i32_0 = arith.constant 0 : i32
    %c0_i32_1 = arith.constant 0 : i32
    return %c0_i32, %c0_i32_0 : i32, i32
  }
  func.func @transform_2(%arg0: i32, %arg1: i32) -> (i32, i32) {
    %c0_i32 = arith.constant 0 : i32
    %c0_i32_0 = arith.constant 0 : i32
    %c0_i32_1 = arith.constant 0 : i32
    return %c0_i32, %c0_i32_0 : i32, i32
  }
  func.func @transform_3(%arg0: i32, %arg1: i32) -> (i32, i32) {
    %c0_i32 = arith.constant 0 : i32
    %c0_i32_0 = arith.constant 0 : i32
    %c0_i32_1 = arith.constant 0 : i32
    return %c0_i32, %c0_i32_0 : i32, i32
  }
  func.func @transform_4(%arg0: i32, %arg1: i32) -> (i32, i32) {
    %c0_i32 = arith.constant 0 : i32
    %c0_i32_0 = arith.constant 0 : i32
    %c0_i32_1 = arith.constant 0 : i32
    return %c0_i32, %c0_i32_0 : i32, i32
  }
  func.func @transform_5(%arg0: i32, %arg1: i32) -> (i32, i32) {
    %c0_i32 = arith.constant 0 : i32
    %c0_i32_0 = arith.constant 0 : i32
    %c0_i32_1 = arith.constant 0 : i32
    return %c0_i32, %c0_i32_0 : i32, i32
  }
  func.func @transform_6(%arg0: i32, %arg1: i32) -> (i32, i32, i32) {
    %c0_i32 = arith.constant 0 : i32
    %c0_i32_0 = arith.constant 0 : i32
    return %arg0, %c0_i32, %arg1 : i32, i32, i32
  }
}

</mosaic_0001>

<llo_original>
// kernel: tpu_custom_call.1
$region0: #{tpu_custom_call.1}
  #allocation0 [shape = 'u32[]', space=smem, size = 0x4, offset = 0x4, fixed_abs, tag = 'smem constant byte address 0x4 - core index']
  #allocation1 [shape = 'u32[144,128]{1,0:T(1,128)}', space=vmem, size = 0x12000, scoped, tag = 'internal scratch']
  #allocation2 [shape = 'f32[4,448]{1,0:T(4,128)}', space=vmem, size = 0x2000, scoped, tag = 'scratch operand']
  #allocation3 [shape = 'bf16[4,416]{1,0:T(4,128)(2,1)}', space=vmem, size = 0x1000, scoped, tag = 'scratch operand']
  #allocation4 [shape = 'bf16[36,160]{1,0:T(8,128)(2,1)}', space=vmem, size = 0x5000, scoped, tag = 'scratch operand']
  %s0 = inlined_call_operand.hbm [shape: f32[2,4,320], index: 0, kind: input, shape index: {}]
  %s1 = inlined_call_operand.vmem [shape: bf16[4,36], index: 1, kind: input, shape index: {}]
  %s2 = inlined_call_operand.vmem [shape: f32[4,1], index: 2, kind: input, shape index: {}]
  %s3 = inlined_call_operand.vmem [shape: bf16[4,36], index: 3, kind: input, shape index: {}]
  %s4 = inlined_call_operand.vmem [shape: f32[4,1], index: 4, kind: input, shape index: {}]
  %s5 = inlined_call_operand.vmem [shape: f32[2,160], index: 5, kind: input, shape index: {}]
  %s6 = inlined_call_operand.hbm [shape: f32[2,4,256], index: 6, kind: output, shape index: {}]
  %s7 = sld [smem:[#allocation0]]
  $region69: #{tpu_custom_call.1} parent=0
    _
  %s9 = ssub.s32 1, %s7
  %s10 = scalar_select 0, %s9, %s7
  $region1: #{tpu_custom_call.1} parent=0
    #allocation5 [shape = 'u8[12288]{0}', space=vmem, size = 0x3000, scoped, tag = 'input window, operand 0']
    #allocation6 [shape = 's32[2]{0}', space=sflag, size = 0x8, scoped, tag = 'scoped memory for tpu_custom_call.1']
    #allocation7 [shape = 's32[2]{0}', space=sflag, size = 0x8, scoped, tag = 'scoped memory for tpu_custom_call.1']
    #allocation8 [shape = 'u8[4096]{0}', space=vmem, size = 0x1000, scoped, tag = 'output window, operand 0']
    %11 = vsyncpa [#allocation6], 0
    %s12 = scalar_lea.sflag [#allocation6], 1
    %13 = vsyncpa %s12, 0
    %14 = vsyncpa [#allocation7], 0
    %s15 = scalar_lea.sflag [#allocation7], 1
    %16 = vsyncpa %s15, 0
    loop: start=0, step=1, limit=6
    $region2: #{tpu_custom_call.1} parent=1 // loop_pre_header
      _
    $region3: #{tpu_custom_call.1} parent=1 // loop_header
      %s18 = sphi 0, %s22
      %p19 = scmp.ge.s32.totalorder %s18, 6
      %s25 = sphi 0, %s37
      %s26 = sphi 0, %s33
      %s27 = sphi 0, %s25
      %s28 = sphi 0, %s26
      %s29 = sphi 0, %s27
      %s30 = sphi 0, %s28
      %s40 = sphi 0, %s42
      %s43 = sphi 0, %s40
      %s44 = sphi 0, %s43
      %s60 = sphi 0, %s44
      %s64 = sphi 0, %s64
      %s66 = sphi 0, %s64
      %s67 = sphi 0, %s66
      %s81 = sphi 0, %s67
      %s85 = sphi 0, %s85
      %s87 = sphi 0, %s85
      %s88 = sphi 0, %s87
      %s102 = sphi 0, %s88
      %s106 = sphi 0, %s106
      %s108 = sphi 0, %s106
      %s109 = sphi 0, %s108
      %s123 = sphi 0, %s109
      %s127 = sphi 0, %s127
      %s129 = sphi 0, %s127
      %s130 = sphi 0, %s129
      %s144 = sphi 0, %s130
      %s148 = sphi 0, %s148
      %s150 = sphi 0, %s148
      %s151 = sphi 0, %s150
      %s165 = sphi 0, %s151
      %s173 = sphi 0, %s175
      %s176 = sphi 0, %s173
      %s177 = sphi 0, %s176
      %s193 = sphi 0, %s177
    $region4: #{tpu_custom_call.1} parent=1 // loop_header_branch
      %21 = sbr.rel (%p19) target = $region8
    $region5: #{tpu_custom_call.1} parent=1 // loop_body
      %s23 = ssub.s32 %s18, 1
      %s24 = ssub.s32 %s18, 2
      %s31 = sadd.s32 1, %s26
      %p32 = scmp.ge.s32.totalorder %s31, 2
      %s33 = scalar_select %p32, 0, %s31
      %s34 = sadd.s32 1, %s25
      %s35 = scalar_select %p32, %s34, %s25
      %p36 = scmp.ge.s32.totalorder %s35, 2
      %s37 = scalar_select %p36, 0, %s35
      %s38 = ssub.s32 %s25, %s37
      %p39 = scmp.eq.s32.totalorder %s38, 0
      %s41 = sadd.s32 %s40, 1
      %s42 = scalar_select %p39, %s40, %s41
      %p45 = pneg %p39
      %p46 = scmp.eq.s32.totalorder %s18, 3
      %p47 = por %p45, %p46
      %p48 = scmp.ne.s32.totalorder %s40, %s43
      %p49 = scmp.eq.s32.totalorder %s18, 0
      %p50 = por %p48, %p49
      %p51 = scmp.ne.s32.totalorder %s40, %s43
      %p52 = scmp.eq.s32.totalorder %s23, 3
      %p53 = por %p51, %p52
      %p54 = scmp.ne.s32.totalorder %s43, %s44
      %p55 = scmp.eq.s32.totalorder %s23, 0
      %p56 = por %p54, %p55
      %p57 = scmp.ne.s32.totalorder %s43, %s44
      %p58 = scmp.eq.s32.totalorder %s24, 3
      %p59 = por %p57, %p58
      %p61 = scmp.ne.s32.totalorder %s44, %s60
      %p62 = scmp.eq.s32.totalorder %s24, 0
      %p63 = por %p61, %p62
      %s65 = sadd.s32 %s64, 1
      %p68 = scmp.eq.s32.totalorder %s18, 3
      %p69 = scmp.ne.s32.totalorder %s64, %s66
      %p70 = scmp.eq.s32.totalorder %s18, 0
      %p71 = por %p69, %p70
      %p72 = scmp.ne.s32.totalorder %s64, %s66
      %p73 = scmp.eq.s32.totalorder %s23, 3
      %p74 = por %p72, %p73
      %p75 = scmp.ne.s32.totalorder %s66, %s67
      %p76 = scmp.eq.s32.totalorder %s23, 0
      %p77 = por %p75, %p76
      %p78 = scmp.ne.s32.totalorder %s66, %s67
      %p79 = scmp.eq.s32.totalorder %s24, 3
      %p80 = por %p78, %p79
      %p82 = scmp.ne.s32.totalorder %s67, %s81
      %p83 = scmp.eq.s32.totalorder %s24, 0
      %p84 = por %p82, %p83
      %s86 = sadd.s32 %s85, 1
      %p89 = scmp.eq.s32.totalorder %s18, 3
      %p90 = scmp.ne.s32.totalorder %s85, %s87
      %p91 = scmp.eq.s32.totalorder %s18, 0
      %p92 = por %p90, %p91
      %p93 = scmp.ne.s32.totalorder %s85, %s87
      %p94 = scmp.eq.s32.totalorder %s23, 3
      %p95 = por %p93, %p94
      %p96 = scmp.ne.s32.totalorder %s87, %s88
      %p97 = scmp.eq.s32.totalorder %s23, 0
      %p98 = por %p96, %p97
      %p99 = scmp.ne.s32.totalorder %s87, %s88
      %p100 = scmp.eq.s32.totalorder %s24, 3
      %p101 = por %p99, %p100
      %p103 = scmp.ne.s32.totalorder %s88, %s102
      %p104 = scmp.eq.s32.totalorder %s24, 0
      %p105 = por %p103, %p104
      %s107 = sadd.s32 %s106, 1
      %p110 = scmp.eq.s32.totalorder %s18, 3
      %p111 = scmp.ne.s32.totalorder %s106, %s108
      %p112 = scmp.eq.s32.totalorder %s18, 0
      %p113 = por %p111, %p112
      %p114 = scmp.ne.s32.totalorder %s106, %s108
      %p115 = scmp.eq.s32.totalorder %s23, 3
      %p116 = por %p114, %p115
      %p117 = scmp.ne.s32.totalorder %s108, %s109
      %p118 = scmp.eq.s32.totalorder %s23, 0
      %p119 = por %p117, %p118
      %p120 = scmp.ne.s32.totalorder %s108, %s109
      %p121 = scmp.eq.s32.totalorder %s24, 3
      %p122 = por %p120, %p121
      %p124 = scmp.ne.s32.totalorder %s109, %s123
      %p125 = scmp.eq.s32.totalorder %s24, 0
      %p126 = por %p124, %p125
      %s128 = sadd.s32 %s127, 1
      %p131 = scmp.eq.s32.totalorder %s18, 3
      %p132 = scmp.ne.s32.totalorder %s127, %s129
      %p133 = scmp.eq.s32.totalorder %s18, 0
      %p134 = por %p132, %p133
      %p135 = scmp.ne.s32.totalorder %s127, %s129
      %p136 = scmp.eq.s32.totalorder %s23, 3
      %p137 = por %p135, %p136
      %p138 = scmp.ne.s32.totalorder %s129, %s130
      %p139 = scmp.eq.s32.totalorder %s23, 0
      %p140 = por %p138, %p139
      %p141 = scmp.ne.s32.totalorder %s129, %s130
      %p142 = scmp.eq.s32.totalorder %s24, 3
      %p143 = por %p141, %p142
      %p145 = scmp.ne.s32.totalorder %s130, %s144
      %p146 = scmp.eq.s32.totalorder %s24, 0
      %p147 = por %p145, %p146
      %s149 = sadd.s32 %s148, 1
      %p152 = scmp.eq.s32.totalorder %s18, 3
      %p153 = scmp.ne.s32.totalorder %s148, %s150
      %p154 = scmp.eq.s32.totalorder %s18, 0
      %p155 = por %p153, %p154
      %p156 = scmp.ne.s32.totalorder %s148, %s150
      %p157 = scmp.eq.s32.totalorder %s23, 3
      %p158 = por %p156, %p157
      %p159 = scmp.ne.s32.totalorder %s150, %s151
      %p160 = scmp.eq.s32.totalorder %s23, 0
      %p161 = por %p159, %p160
      %p162 = scmp.ne.s32.totalorder %s150, %s151
      %p163 = scmp.eq.s32.totalorder %s24, 3
      %p164 = por %p162, %p163
      %p166 = scmp.ne.s32.totalorder %s151, %s165
      %p167 = scmp.eq.s32.totalorder %s24, 0
      %p168 = por %p166, %p167
      %s169 = ssub.s32 %s25, %s37
      %s170 = ssub.s32 %s26, %s33
      %s171 = sor.u32 %s169, %s170
      %p172 = scmp.eq.s32.totalorder %s171, 0
      %s174 = sadd.s32 %s173, 1
      %s175 = scalar_select %p172, %s173, %s174
      %p178 = pneg %p172
      %p179 = scmp.eq.s32.totalorder %s18, 3
      %p180 = por %p178, %p179
      %p181 = scmp.ne.s32.totalorder %s173, %s176
      %p182 = scmp.eq.s32.totalorder %s18, 0
      %p183 = por %p181, %p182
      %p184 = scmp.ne.s32.totalorder %s173, %s176
      %p185 = scmp.eq.s32.totalorder %s23, 3
      %p186 = por %p184, %p185
      %p187 = scmp.ne.s32.totalorder %s176, %s177
      %p188 = scmp.eq.s32.totalorder %s23, 0
      %p189 = por %p187, %p188
      %p190 = scmp.ne.s32.totalorder %s176, %s177
      %p191 = scmp.eq.s32.totalorder %s24, 3
      %p192 = por %p190, %p191
      %p194 = scmp.ne.s32.totalorder %s177, %s193
      %p195 = scmp.eq.s32.totalorder %s24, 0
      %p196 = por %p194, %p195
      %p197 = scmp.le.s32.totalorder 1, %s18
      %p198 = scmp.lt.s32.totalorder %s18, 5
      %p199 = pnand %p197, %p198
      %p200 = pneg %p199
      // Predicated region
      $region9: #{tpu_custom_call.1} parent=5 // pred_check
        _
      $region10: #{tpu_custom_call.1} parent=5 // pred_check_branch
        %202 = sbr.rel (%p199) target = $region12
      $region11: #{tpu_custom_call.1} parent=5 // pred_region
        %s203 = ssub.s32 %s18, 1
        // Predicated region
        $region13: #{tpu_custom_call.1} parent=11 // pred_check
          %p204 = pneg %p77
        $region14: #{tpu_custom_call.1} parent=11 // pred_check_branch
          %206 = sbr.rel (%p204) target = $region16
        $region15: #{tpu_custom_call.1} parent=11 // pred_region
          _
        $region16: #{tpu_custom_call.1} parent=11 // pred_fallthru
          _
        // Predicated region
        $region17: #{tpu_custom_call.1} parent=11 // pred_check
          %p207 = pneg %p98
        $region18: #{tpu_custom_call.1} parent=11 // pred_check_branch
          %209 = sbr.rel (%p207) target = $region20
        $region19: #{tpu_custom_call.1} parent=11 // pred_region
          _
        $region20: #{tpu_custom_call.1} parent=11 // pred_fallthru
          _
        // Predicated region
        $region21: #{tpu_custom_call.1} parent=11 // pred_check
          %p210 = pneg %p119
        $region22: #{tpu_custom_call.1} parent=11 // pred_check_branch
          %212 = sbr.rel (%p210) target = $region24
        $region23: #{tpu_custom_call.1} parent=11 // pred_region
          _
        $region24: #{tpu_custom_call.1} parent=11 // pred_fallthru
          _
        // Predicated region
        $region25: #{tpu_custom_call.1} parent=11 // pred_check
          %p213 = pneg %p140
        $region26: #{tpu_custom_call.1} parent=11 // pred_check_branch
          %215 = sbr.rel (%p213) target = $region28
        $region27: #{tpu_custom_call.1} parent=11 // pred_region
          _
        $region28: #{tpu_custom_call.1} parent=11 // pred_fallthru
          _
        // Predicated region
        $region29: #{tpu_custom_call.1} parent=11 // pred_check
          %p216 = pneg %p161
        $region30: #{tpu_custom_call.1} parent=11 // pred_check_branch
          %218 = sbr.rel (%p216) target = $region32
        $region31: #{tpu_custom_call.1} parent=11 // pred_region
          _
        $region32: #{tpu_custom_call.1} parent=11 // pred_fallthru
          _
      $region12: #{tpu_custom_call.1} parent=5 // pred_fallthru
        _
      %p219 = scmp.lt.s32.totalorder %s18, 4
      // Predicated region
      $region33: #{tpu_custom_call.1} parent=5 // pred_check
        %p220 = pneg %p219
      $region34: #{tpu_custom_call.1} parent=5 // pred_check_branch
        %222 = sbr.rel (%p220) target = $region36
      $region35: #{tpu_custom_call.1} parent=5 // pred_region
        // Predicated region
        $region37: #{tpu_custom_call.1} parent=35 // pred_check
          %p223 = pneg %p50
        $region38: #{tpu_custom_call.1} parent=35 // pred_check_branch
          %225 = sbr.rel (%p223) target = $region40
        $region39: #{tpu_custom_call.1} parent=35 // pred_region
          %s226 = sand.u32 %s40, 1
          %s227 = scalar_lea.sflag [#allocation6], %s226
          %s228 = sand.u32 %s40, 1
          %s229 = smul.addr %s228, 12
          %s230 = scalar_lea.vmem [#allocation5], %s229
          %s232 = ssub.s32 192, 192
          %233 = vsyncadd %s227, %s232
          %s234 = smul.addr %s25, 3
          %s235 = smul.addr %s234, 64
          %s236 = scalar_lea.hbm %s0, %s235
          %s238 = sshll.u32 %s230, 4
          %s239 = int_to_ptr.vmem [resolvable:$true] %s238
          %241 = dma.hbm_to_vmem [thread:$0]  %s236, 192, %s239, %s227
        $region40: #{tpu_custom_call.1} parent=35 // pred_fallthru
          _
      $region36: #{tpu_custom_call.1} parent=5 // pred_fallthru
        _
      %p242 = scmp.le.s32.totalorder 1, %s18
      %p243 = scmp.lt.s32.totalorder %s18, 5
      %p244 = pnand %p242, %p243
      %p245 = pneg %p244
      // Predicated region
      $region41: #{tpu_custom_call.1} parent=5 // pred_check
        _
      $region42: #{tpu_custom_call.1} parent=5 // pred_check_branch
        %247 = sbr.rel (%p244) target = $region44
      $region43: #{tpu_custom_call.1} parent=5 // pred_region
        %s248 = ssub.s32 %s18, 1
        %s249 = sand.u32 %s43, 1
        %s250 = scalar_lea.sflag [#allocation6], %s249
        %s251 = sand.u32 %s43, 1
        %s252 = smul.addr %s251, 12
        %s253 = scalar_lea.vmem [#allocation5], %s252
        // Predicated region
        $region45: #{tpu_custom_call.1} parent=43 // pred_check
          %p254 = pneg %p56
        $region46: #{tpu_custom_call.1} parent=43 // pred_check_branch
          %256 = sbr.rel (%p254) target = $region48
        $region47: #{tpu_custom_call.1} parent=43 // pred_region
          %257 = dma.done %s250, 192
        $region48: #{tpu_custom_call.1} parent=43 // pred_fallthru
          _
        %s258 = sand.u32 %s43, 1
        %s259 = scalar_lea.sflag [#allocation6], %s258
        %s260 = sand.u32 %s43, 1
        %s261 = smul.addr %s260, 12
        %s262 = scalar_lea.vmem [#allocation5], %s261
        %p263 = pneg %p56
        %p264 = pneg %p53
        %p265 = pneg %p77
        %p266 = pneg %p74
        %p267 = pneg %p98
        %p268 = pneg %p95
        %p269 = pneg %p119
        %p270 = pneg %p116
        %p271 = pneg %p140
        %p272 = pneg %p137
        %p273 = pneg %p161
        %p274 = pneg %p158
        %p275 = pneg %p189
        %p276 = pneg %p186
        %s277 = sand.u32 %s176, 1
        %s278 = scalar_lea.sflag [#allocation7], %s277
        %s279 = sand.u32 %s176, 1
        %s280 = smul.addr %s279, 4
        %s281 = scalar_lea.vmem [#allocation8], %s280
        %v285 = vld [vmem:[%s5] ss:$2 sm:$0x3]
        %vm286 = vcmp.gt.f32.partialorder %v285, 0.5
        %s287 = scalar_lea.vmem %s5, 1
        %v288 = vld [vmem:[%s287] ss:$2 sm:$0x3]
        %vm289 = vcmp.gt.f32.partialorder %v288, 0.5
        %s290 = smul.u32 %s28, 128
        %s291 = sshra.s32 %s290, 7
        %s292 = sand.u32 %s290, 127
        %s293 = smul.addr %s291, 4
        %s294 = scalar_lea.vmem %s253, %s293 [#allocation5]
        %v295 = vld [vmem:[%s294] sm:$0xff]
        %vm296 = vcmask 1043456
        %vm297 = vcmask 523268
        %vm298 = vmor %vm297, %vm296
        %299 = vst.msk [vmem:[#allocation2 + $0x4] sm:$0xff] %vm298, %v295
        %v300 = vld [vmem:[#allocation2] sm:$0xff]
        %v301 = vld [vmem:[#allocation2 + $0x8] sm:$0xf]
        %v302 = vsel %vm286, 1, 0
        %v303 = vlaneseq
        %v304 = vshrl.u32 %v303, 7
        %v305 = vsub.s32 0, %v304
        %v306 = vrot.slane %v302, %v305
        %v307 = vlaneseq
        %v308 = vshrl.u32 %v307, 7
        %v309 = vsub.s32 1, %v308
        %v310 = vrot.slane %v302, %v309
        %vm311 = vcmp.eq.s32.totalorder %v306, 1
        %vm312 = vcmp.eq.s32.totalorder %v310, 1
        %v315 = vcombine.high %v300, %v300
        %316 = vrot.lane.b32.xlu0 %v300, 1
        %v317 = vpop.permute.xlu0 %316
        %318 = vrot.lane.b32.xlu0 %v315, 1
        %v319 = vpop.permute.xlu0 %318
        %320 = vrot.lane.b32.xlu0 %v301, 1
        %v321 = vpop.permute.xlu0 %320
        %vm322 = vcmask 7168
        %v323 = vsel %vm322, %v317, %v319
        %v324 = vsel %vm322, %v319, %v321
        %v327 = vsel %vm311, %v323, 0.0
        %v328 = vsel %vm312, %v324, 0.0
        %v329 = vpack.c.bf16 %v327, %v327
        %v330 = vpack.c.bf16 %v328, %v328
        %v333 = vunpack.c.l.b16 %v329
        %v334 = vunpack.c.l.b16 %v330
        %v335 = vpack.c.b16 %v334, %v333
        %vm337 = vcmask 1041408
        %vm338 = vcmask 259076
        %vm339 = vmor %vm338, %vm337
        %340 = vst.msk [vmem:[#allocation4] sm:$0x33] %vm339, %v335
        %v341 = vld [vmem:[#allocation2 + $0x4] sm:$0xff]
        %v343 = vcombine.high %v341, %v341
        %v345 = vpack.c.bf16 %v341, %v341
        %v346 = vpack.c.bf16 %v343, %v343
        %v349 = vunpack.c.l.b16 %v345
        %v350 = vunpack.c.l.b16 %v346
        %v351 = vpack.c.b16 %v350, %v349
        %v352 = vrot.slane %v351, 6
        %vm354 = vcmask 1043458
        %vm355 = vcmask 261126
        %vm356 = vmor %vm355, %vm354
        %357 = vst.msk [vmem:[#allocation4] sm:$0xcc] %vm356, %v352
        %v358 = vld [vmem:[#allocation2 + $0x4] sm:$0xff]
        %v359 = vsel %vm289, 1, 0
        %v360 = vlaneseq
        %v361 = vshrl.u32 %v360, 7
        %v362 = vsub.s32 0, %v361
        %v363 = vrot.slane %v359, %v362
        %v364 = vlaneseq
        %v365 = vshrl.u32 %v364, 7
        %v366 = vsub.s32 1, %v365
        %v367 = vrot.slane %v359, %v366
        %vm368 = vcmp.eq.s32.totalorder %v363, 1
        %vm369 = vcmp.eq.s32.totalorder %v367, 1
        %v371 = vcombine.high %v358, %v358
        %372 = vrot.lane.b32.xlu0 %v358, 127
        %v373 = vpop.permute.xlu0 %372
        %374 = vrot.lane.b32.xlu0 %v371, 127
        %v375 = vpop.permute.xlu0 %374
        %vm376 = vcmask 1039360
        %v377 = vsel %vm376, %v373, %v375
        %v380 = vsel %vm368, %v377, 0.0
        %v381 = vsel %vm369, %v375, 0.0
        %v382 = vpack.c.bf16 %v380, %v380
        %v383 = vpack.c.bf16 %v381, %v381
        %v386 = vunpack.c.l.b16 %v382
        %v387 = vunpack.c.l.b16 %v383
        %v388 = vpack.c.b16 %v387, %v386
        %390 = vst.msk [vmem:[#allocation4 + $0x8] sm:$0x33] %vm339, %v388
        %v391 = vld [vmem:[#allocation2 + $0x4] sm:$0xff]
        %v393 = vcombine.high %v391, %v391
        %394 = vrot.lane.b32.xlu0 %v391, 113
        %v395 = vpop.permute.xlu0 %394
        %396 = vrot.lane.b32.xlu0 %v393, 113
        %v397 = vpop.permute.xlu0 %396
        %vm398 = vcmask 924672
        %v399 = vsel %vm398, %v395, %v397
        %v402 = vsel %vm311, %v399, 0.0
        %v403 = vsel %vm312, %v397, 0.0
        %v404 = vpack.c.bf16 %v402, %v402
        %v405 = vpack.c.bf16 %v403, %v403
        %v408 = vunpack.c.l.b16 %v404
        %v409 = vunpack.c.l.b16 %v405
        %v410 = vpack.c.b16 %v409, %v408
        %v411 = vrot.slane %v410, 6
        %413 = vst.msk [vmem:[#allocation4 + $0x8] sm:$0xcc] %vm356, %v411
        %v414 = vld [vmem:[#allocation2 + $0x4] sm:$0xff]
        %v416 = vcombine.high %v414, %v414
        %v418 = vpack.c.bf16 %v414, %v414
        %v419 = vpack.c.bf16 %v416, %v416
        %v422 = vunpack.c.l.b16 %v418
        %v423 = vunpack.c.l.b16 %v419
        %v424 = vpack.c.b16 %v423, %v422
        %425 = vrot.lane.b32.xlu0 %v424, 112
        %v426 = vpop.permute.xlu0 %425
        %v427 = vrot.slane %v426, 4
        %vm428 = vcmask 916480
        %v429 = vsel %vm428, %v426, %v427
        %431 = vst.msk [vmem:[#allocation4 + $0x10] sm:$0x33] %vm339, %v429
        %v432 = vld [vmem:[#allocation2 + $0x4] sm:$0xff]
        %v434 = vcombine.high %v432, %v432
        %435 = vrot.lane.b32.xlu0 %v432, 111
        %v436 = vpop.permute.xlu0 %435
        %437 = vrot.lane.b32.xlu0 %v434, 111
        %v438 = vpop.permute.xlu0 %437
        %vm439 = vcmask 908288
        %v440 = vsel %vm439, %v436, %v438
        %v443 = vsel %vm368, %v440, 0.0
        %v444 = vsel %vm369, %v438, 0.0
        %v445 = vpack.c.bf16 %v443, %v443
        %v446 = vpack.c.bf16 %v444, %v444
        %v449 = vunpack.c.l.b16 %v445
        %v450 = vunpack.c.l.b16 %v446
        %v451 = vpack.c.b16 %v450, %v449
        %v452 = vrot.slane %v451, 6
        %454 = vst.msk [vmem:[#allocation4 + $0x10] sm:$0xcc] %vm356, %v452
        %v455 = vld [vmem:[#allocation2 + $0x4] sm:$0xff]
        %v457 = vcombine.high %v455, %v455
        %458 = vrot.lane.b32.xlu0 %v455, 97
        %v459 = vpop.permute.xlu0 %458
        %460 = vrot.lane.b32.xlu0 %v457, 97
        %v461 = vpop.permute.xlu0 %460
        %vm462 = vcmask 793600
        %v463 = vsel %vm462, %v459, %v461
        %v466 = vsel %vm311, %v463, 0.0
        %v467 = vsel %vm312, %v461, 0.0
        %v468 = vpack.c.bf16 %v466, %v466
        %v469 = vpack.c.bf16 %v467, %v467
        %v472 = vunpack.c.l.b16 %v468
        %v473 = vunpack.c.l.b16 %v469
        %v474 = vpack.c.b16 %v473, %v472
        %476 = vst.msk [vmem:[#allocation4 + $0x18] sm:$0x33] %vm339, %v474
        %v477 = vld [vmem:[#allocation2 + $0x4] sm:$0xff]
        %v479 = vcombine.high %v477, %v477
        %v481 = vpack.c.bf16 %v477, %v477
        %v482 = vpack.c.bf16 %v479, %v479
        %v485 = vunpack.c.l.b16 %v481
        %v486 = vunpack.c.l.b16 %v482
        %v487 = vpack.c.b16 %v486, %v485
        %v488 = vrot.slane %v487, 6
        %489 = vrot.lane.b32.xlu0 %v488, 96
        %v490 = vpop.permute.xlu0 %489
        %v491 = vrot.slane %v490, 4
        %vm492 = vcmask 785408
        %v493 = vsel %vm492, %v490, %v491
        %495 = vst.msk [vmem:[#allocation4 + $0x18] sm:$0xcc] %vm356, %v493
        %v496 = vld [vmem:[#allocation2 + $0x4] sm:$0xff]
        %v498 = vcombine.high %v496, %v496
        %499 = vrot.lane.b32.xlu0 %v496, 95
        %v500 = vpop.permute.xlu0 %499
        %501 = vrot.lane.b32.xlu0 %v498, 95
        %v502 = vpop.permute.xlu0 %501
        %vm503 = vcmask 777216
        %v504 = vsel %vm503, %v500, %v502
        %v507 = vsel %vm368, %v504, 0.0
        %v508 = vsel %vm369, %v502, 0.0
        %v509 = vpack.c.bf16 %v507, %v507
        %v510 = vpack.c.bf16 %v508, %v508
        %v513 = vunpack.c.l.b16 %v509
        %v514 = vunpack.c.l.b16 %v510
        %v515 = vpack.c.b16 %v514, %v513
        %517 = vst.msk [vmem:[#allocation4 + $0x20] sm:$0x33] %vm339, %v515
        %v518 = vld [vmem:[%s1] sm:$0x3]
        %v519 = vld [vmem:[#allocation4] sm:$0xff]
        %v520 = vld [vmem:[#allocation4 + $0x8] sm:$0xff]
        %v521 = vld [vmem:[#allocation4 + $0x10] sm:$0xff]
        %v522 = vld [vmem:[#allocation4 + $0x18] sm:$0xff]
        %v523 = vld [vmem:[#allocation4 + $0x20] sm:$0x33]
        %v524 = vld [vmem:[%s2] sm:$0xf]
        %526 = vset.pattern.permute.xlu0 0
        %527 = vperm.xlu0 %526, %v524
        %v528 = vpop.permute.xlu0 %527
        %v535 = vunpack.c.l.b16 %v519
        %v536 = vunpack.c.h.b16 %v519
        %v537 = vunpack.c.l.b16 %v520
        %v538 = vunpack.c.h.b16 %v520
        %v539 = vunpack.c.l.b16 %v521
        %v540 = vunpack.c.h.b16 %v521
        %v541 = vunpack.c.l.b16 %v522
        %v542 = vunpack.c.h.b16 %v522
        %v543 = vunpack.c.l.b16 %v523
        %v544 = vunpack.c.h.b16 %v523
        %v545 = vpack.c.b16 %v537, %v535
        %v546 = vpack.c.b16 %v538, %v536
        %v547 = vpack.c.b16 %v541, %v539
        %v548 = vpack.c.b16 %v542, %v540
        %v549 = vpack.c.b16 %v543, %v543
        %v550 = vpack.c.b16 %v544, %v544
        %vm555 = vcmask 293888
        %v557 = vsel %vm555, %v518, 0
        %v560 = vsel %vm337, %v549, 0
        %v563 = vsel %vm337, %v550, 0
        %565 = vmatprep.subr.bf16.mxu0 %v546
        %566 = vmatpush1.bf16.msra.mxu0 %v545
        %567 = vmatprep.subr.bf16.mxu0 %v548
        %568 = vmatpush1.bf16.msra.mxu0 %v547
        %569 = vmatprep.subr.bf16.mxu0 %v563
        %570 = vmatpush1.bf16.msra.mxu0 %v560
        %571 = vmatprep.subr.bf16.mxu0 0
        %572 = vmatpush1.bf16.msra.mxu0 0
        %573 = vmatprep.subr.bf16.mxu0 0
        %574 = vmatpush1.bf16.msra.mxu0 0
        %575 = vmatprep.subr.bf16.mxu0 0
        %576 = vmatpush1.bf16.msra.mxu0 0
        %577 = vmatprep.subr.bf16.mxu0 0
        %578 = vmatpush1.bf16.msra.mxu0 0
        %579 = vmatprep.subr.bf16.mxu0 0
        %580 = vmatpush1.bf16.msra.mxu0 0
        %581 = vmatprep.subr.bf16.mxu0 0
        %582 = vmatpush1.bf16.msra.mxu0 0
        %583 = vmatprep.subr.bf16.mxu0 0
        %584 = vmatpush1.bf16.msra.mxu0 0
        %585 = vmatprep.subr.bf16.mxu0 0
        %586 = vmatpush1.bf16.msra.mxu0 0
        %587 = vmatprep.subr.bf16.mxu0 0
        %588 = vmatpush1.bf16.msra.mxu0 0
        %589 = vmatprep.subr.bf16.mxu0 0
        %590 = vmatpush1.bf16.msra.mxu0 0
        %591 = vmatprep.subr.bf16.mxu0 0
        %592 = vmatpush1.bf16.msra.mxu0 0
        %593 = vmatprep.subr.bf16.mxu0 0
        %594 = vmatpush1.bf16.msra.mxu0 0
        %595 = vmatprep.subr.bf16.mxu0 0
        %596 = vmatpush1.bf16.msra.mxu0 0
        %597 = vmatprep.mubr.bf16.mxu0 0
        %598 = vmatmul.mubr.bf16.gmra.mrb[0].mxu0 %v557
        %v599 = vpop.f32.mrb[0].mxu0
        %v600 = vadd.f32 %v528, %v599
        %v601 = vpop.f32.mrb[0].mxu0
        %v602 = vadd.f32 %v528, %v601
        %v603 = vpop.f32.mrb[0].mxu0
        %v604 = vpop.f32.mrb[0].mxu0
        %605 = vdwg.mxu0
        %v606 = vmax.f32 %v600, 0.0
        %v607 = vmax.f32 %v602, 0.0
        %v608 = vpack.c.bf16 %v606, %v606
        %v609 = vpack.c.bf16 %v607, %v607
        %v612 = vcombine.low %v608, %v609
        %v614 = vunpack.c.l.s4 1983009808
        %v615 = vunpack.c.0.s8 %v614
        %v616 = vlaneseq
        %v617 = vshrl.u32 %v616, 7
        %v618 = vsub.s32 %v615, %v617
        %v619 = vrot.slane %v612, %v618
        %vm621 = vcmask 257026
        %vm622 = vmor %vm621, %vm337
        %623 = vst.msk [vmem:[#allocation3 + $0x2] sm:$0xf] %vm622, %v619
        %p624 = scmp.eq.s32.totalorder %s28, 0
        // Predicated region
        $region49: #{tpu_custom_call.1} parent=43 // pred_check
          %p625 = pneg %p624
        $region50: #{tpu_custom_call.1} parent=43 // pred_check_branch
          %627 = sbr.rel (%p625) target = $region52
        $region51: #{tpu_custom_call.1} parent=43 // pred_region
          %vm628 = vcmask 123904
          %629 = vst.msk [vmem:[#allocation3 + $0x2] sm:$0x3] %vm628, 0
        $region52: #{tpu_custom_call.1} parent=43 // pred_fallthru
          _
        %p630 = scmp.eq.s32.totalorder %s28, 1
        // Predicated region
        $region53: #{tpu_custom_call.1} parent=43 // pred_check
          %p631 = pneg %p630
        $region54: #{tpu_custom_call.1} parent=43 // pred_check_branch
          %633 = sbr.rel (%p631) target = $region56
        $region55: #{tpu_custom_call.1} parent=43 // pred_region
          %vm634 = vcmask 255104
          %635 = vst.msk [vmem:[#allocation3 + $0x4] sm:$0x3] %vm634, 0
        $region56: #{tpu_custom_call.1} parent=43 // pred_fallthru
          _
        %v636 = vld [vmem:[#allocation3] sm:$0xf]
        %v637 = vsel %vm311, 1, 0
        %v638 = vpack.c.b16 %v637, %v637
        %vm639 = vcmp.ne.s16.totalorder %v638, 0
        %v640 = vsel %vm639, 65537, 0
        %641 = vrot.lane.b32.xlu0 %v640, 127
        %v642 = vpop.permute.xlu0 %641
        %v643 = vrot.slane %v642, 6
        %vm644 = vcmask 1039360
        %v645 = vsel %vm644, %v643, %v642
        %vm646 = vcmp.ne.s16.totalorder %v645, 0
        %v647 = vsel %vm646, %v636, 0
        %v650 = vunpack.c.l.s4 1983009808
        %v651 = vunpack.c.0.s8 %v650
        %v652 = vlaneseq
        %v653 = vshrl.u32 %v652, 7
        %v654 = vsub.s32 %v651, %v653
        %v655 = vrot.slane %v647, %v654
        %656 = vrot.lane.b32.xlu0 %v655, 1
        %v657 = vpop.permute.xlu0 %656
        %v658 = vrot.slane %v657, 4
        %vm659 = vcmask 7168
        %v660 = vsel %vm659, %v657, %v658
        %662 = vst [vmem:[#allocation4] sm:$0x3] %v660
        %v663 = vld [vmem:[#allocation3 + $0x2] sm:$0x3]
        %v665 = vcombine.low %v663, %v663
        %v667 = vunpack.c.l.s4 1983009808
        %v668 = vunpack.c.0.s8 %v667
        %v669 = vlaneseq
        %v670 = vshrl.u32 %v669, 7
        %v671 = vsub.s32 %v668, %v670
        %v672 = vrot.slane %v665, %v671
        %674 = vst [vmem:[#allocation4] sm:$0xc] %v672
        %v675 = vld [vmem:[#allocation3 + $0x2] sm:$0xf]
        %v676 = vsel %vm368, 1, 0
        %v677 = vpack.c.b16 %v676, %v676
        %vm678 = vcmp.ne.s16.totalorder %v677, 0
        %v679 = vsel %vm678, 65537, 0
        %680 = vrot.lane.b32.xlu0 %v679, 1
        %v681 = vpop.permute.xlu0 %680
        %v682 = vrot.slane %v681, 6
        %v683 = vsel %vm659, %v682, %v681
        %vm684 = vcmp.ne.s16.totalorder %v683, 0
        %v685 = vsel %vm684, %v675, 0
        %v688 = vunpack.c.l.s4 1983009808
        %v689 = vunpack.c.0.s8 %v688
        %v690 = vlaneseq
        %v691 = vshrl.u32 %v690, 7
        %v692 = vsub.s32 %v689, %v691
        %v693 = vrot.slane %v685, %v692
        %694 = vrot.lane.b32.xlu0 %v693, 127
        %v695 = vpop.permute.xlu0 %694
        %v696 = vrot.slane %v695, 4
        %v697 = vsel %vm644, %v695, %v696
        %699 = vst [vmem:[#allocation4 + $0x8] sm:$0x3] %v697
        %v700 = vld [vmem:[#allocation3 + $0x2] sm:$0xf]
        %701 = vrot.lane.b32.xlu0 %v640, 15
        %v702 = vpop.permute.xlu0 %701
        %v703 = vrot.slane %v702, 6
        %vm704 = vcmask 121856
        %v705 = vsel %vm704, %v703, %v702
        %vm706 = vcmp.ne.s16.totalorder %v705, 0
        %v707 = vsel %vm706, %v700, 0
        %v709 = vcombine.low %v707, %v707
        %v711 = vunpack.c.l.s4 1983009808
        %v712 = vunpack.c.0.s8 %v711
        %v713 = vlaneseq
        %v714 = vshrl.u32 %v713, 7
        %v715 = vsub.s32 %v712, %v714
        %v716 = vrot.slane %v709, %v715
        %717 = vrot.lane.b32.xlu0 %v716, 113
        %v718 = vpop.permute.xlu0 %717
        %v719 = vrot.slane %v718, 4
        %vm720 = vcmask 924672
        %v721 = vsel %vm720, %v718, %v719
        %723 = vst [vmem:[#allocation4 + $0x8] sm:$0xc] %v721
        %v724 = vld [vmem:[#allocation3 + $0x2] sm:$0xf]
        %v727 = vunpack.c.l.s4 1983009808
        %v728 = vunpack.c.0.s8 %v727
        %v729 = vlaneseq
        %v730 = vshrl.u32 %v729, 7
        %v731 = vsub.s32 %v728, %v730
        %v732 = vrot.slane %v724, %v731
        %733 = vrot.lane.b32.xlu0 %v732, 112
        %v734 = vpop.permute.xlu0 %733
        %v735 = vrot.slane %v734, 4
        %v736 = vsel %vm428, %v734, %v735
        %738 = vst [vmem:[#allocation4 + $0x10] sm:$0x3] %v736
        %v739 = vld [vmem:[#allocation3 + $0x2] sm:$0xf]
        %740 = vrot.lane.b32.xlu0 %v679, 17
        %v741 = vpop.permute.xlu0 %740
        %v742 = vrot.slane %v741, 6
        %vm743 = vcmask 138240
        %v744 = vsel %vm743, %v742, %v741
        %vm745 = vcmp.ne.s16.totalorder %v744, 0
        %v746 = vsel %vm745, %v739, 0
        %v748 = vcombine.low %v746, %v746
        %v750 = vunpack.c.l.s4 1983009808
        %v751 = vunpack.c.0.s8 %v750
        %v752 = vlaneseq
        %v753 = vshrl.u32 %v752, 7
        %v754 = vsub.s32 %v751, %v753
        %v755 = vrot.slane %v748, %v754
        %756 = vrot.lane.b32.xlu0 %v755, 111
        %v757 = vpop.permute.xlu0 %756
        %v758 = vrot.slane %v757, 4
        %vm759 = vcmask 908288
        %v760 = vsel %vm759, %v757, %v758
        %762 = vst [vmem:[#allocation4 + $0x10] sm:$0xc] %v760
        %v763 = vld [vmem:[#allocation3 + $0x2] sm:$0xf]
        %764 = vrot.lane.b32.xlu0 %v640, 31
        %v765 = vpop.permute.xlu0 %764
        %v766 = vrot.slane %v765, 6
        %vm767 = vcmask 252928
        %v768 = vsel %vm767, %v766, %v765
        %vm769 = vcmp.ne.s16.totalorder %v768, 0
        %v770 = vsel %vm769, %v763, 0
        %v773 = vunpack.c.l.s4 1983009808
        %v774 = vunpack.c.0.s8 %v773
        %v775 = vlaneseq
        %v776 = vshrl.u32 %v775, 7
        %v777 = vsub.s32 %v774, %v776
        %v778 = vrot.slane %v770, %v777
        %779 = vrot.lane.b32.xlu0 %v778, 97
        %v780 = vpop.permute.xlu0 %779
        %v781 = vrot.slane %v780, 4
        %vm782 = vcmask 793600
        %v783 = vsel %vm782, %v780, %v781
        %785 = vst [vmem:[#allocation4 + $0x18] sm:$0x3] %v783
        %v786 = vld [vmem:[#allocation3 + $0x2] sm:$0xf]
        %v788 = vcombine.low %v786, %v786
        %v790 = vunpack.c.l.s4 1983009808
        %v791 = vunpack.c.0.s8 %v790
        %v792 = vlaneseq
        %v793 = vshrl.u32 %v792, 7
        %v794 = vsub.s32 %v791, %v793
        %v795 = vrot.slane %v788, %v794
        %796 = vrot.lane.b32.xlu0 %v795, 96
        %v797 = vpop.permute.xlu0 %796
        %v798 = vrot.slane %v797, 4
        %v799 = vsel %vm492, %v797, %v798
        %801 = vst [vmem:[#allocation4 + $0x18] sm:$0xc] %v799
        %v802 = vld [vmem:[#allocation3 + $0x2] sm:$0xf]
        %803 = vrot.lane.b32.xlu0 %v679, 33
        %v804 = vpop.permute.xlu0 %803
        %v805 = vrot.slane %v804, 6
        %vm806 = vcmask 269312
        %v807 = vsel %vm806, %v805, %v804
        %vm808 = vcmp.ne.s16.totalorder %v807, 0
        %v809 = vsel %vm808, %v802, 0
        %v812 = vunpack.c.l.s4 1983009808
        %v813 = vunpack.c.0.s8 %v812
        %v814 = vlaneseq
        %v815 = vshrl.u32 %v814, 7
        %v816 = vsub.s32 %v813, %v815
        %v817 = vrot.slane %v809, %v816
        %818 = vrot.lane.b32.xlu0 %v817, 95
        %v819 = vpop.permute.xlu0 %818
        %v820 = vrot.slane %v819, 4
        %vm821 = vcmask 777216
        %v822 = vsel %vm821, %v819, %v820
        %824 = vst [vmem:[#allocation4 + $0x20] sm:$0x3] %v822
        %v825 = vld [vmem:[%s3] sm:$0x3]
        %v826 = vld [vmem:[#allocation4] sm:$0xf]
        %v827 = vld [vmem:[#allocation4 + $0x8] sm:$0xf]
        %v828 = vld [vmem:[#allocation4 + $0x10] sm:$0xf]
        %v829 = vld [vmem:[#allocation4 + $0x18] sm:$0xf]
        %v830 = vld [vmem:[#allocation4 + $0x20] sm:$0x3]
        %v831 = vld [vmem:[#allocation2 + $0x4] sm:$0xff]
        %v832 = vld [vmem:[%s4] sm:$0xf]
        %834 = vset.pattern.permute.xlu0 0
        %835 = vperm.xlu0 %834, %v832
        %v836 = vpop.permute.xlu0 %835
        %v843 = vunpack.c.l.b16 %v826
        %v844 = vunpack.c.l.b16 %v827
        %v845 = vunpack.c.l.b16 %v828
        %v846 = vunpack.c.l.b16 %v829
        %v847 = vunpack.c.l.b16 %v830
        %v848 = vpack.c.b16 %v844, %v843
        %v849 = vpack.c.b16 %v846, %v845
        %v850 = vpack.c.b16 %v847, %v847
        %v854 = vsel %vm555, %v825, 0
        %v857 = vsel %vm337, %v850, 0
        %859 = vmatprep.subr.bf16.mxu0 0
        %860 = vmatpush1.bf16.msra.mxu0 %v848
        %861 = vmatprep.subr.bf16.mxu0 0
        %862 = vmatpush1.bf16.msra.mxu0 %v849
        %863 = vmatprep.subr.bf16.mxu0 0
        %864 = vmatpush1.bf16.msra.mxu0 %v857
        %865 = vmatprep.subr.bf16.mxu0 0
        %866 = vmatpush1.bf16.msra.mxu0 0
        %867 = vmatprep.subr.bf16.mxu0 0
        %868 = vmatpush1.bf16.msra.mxu0 0
        %869 = vmatprep.subr.bf16.mxu0 0
        %870 = vmatpush1.bf16.msra.mxu0 0
        %871 = vmatprep.subr.bf16.mxu0 0
        %872 = vmatpush1.bf16.msra.mxu0 0
        %873 = vmatprep.subr.bf16.mxu0 0
        %874 = vmatpush1.bf16.msra.mxu0 0
        %875 = vmatprep.subr.bf16.mxu0 0
        %876 = vmatpush1.bf16.msra.mxu0 0
        %877 = vmatprep.subr.bf16.mxu0 0
        %878 = vmatpush1.bf16.msra.mxu0 0
        %879 = vmatprep.subr.bf16.mxu0 0
        %880 = vmatpush1.bf16.msra.mxu0 0
        %881 = vmatprep.subr.bf16.mxu0 0
        %882 = vmatpush1.bf16.msra.mxu0 0
        %883 = vmatprep.subr.bf16.mxu0 0
        %884 = vmatpush1.bf16.msra.mxu0 0
        %885 = vmatprep.subr.bf16.mxu0 0
        %886 = vmatpush1.bf16.msra.mxu0 0
        %887 = vmatprep.subr.bf16.mxu0 0
        %888 = vmatpush1.bf16.msra.mxu0 0
        %889 = vmatprep.subr.bf16.mxu0 0
        %890 = vmatpush1.bf16.msra.mxu0 0
        %891 = vmatprep.mubr.bf16.mxu0 0
        %892 = vmatmul.mubr.bf16.gmra.mrb[0].mxu0 %v854
        %v893 = vpop.f32.mrb[0].mxu0
        %v894 = vadd.f32 %v836, %v893
        %v895 = vpop.f32.mrb[0].mxu0
        %v896 = vpop.f32.mrb[0].mxu0
        %v897 = vpop.f32.mrb[0].mxu0
        %898 = vdwg.mxu0
        %v900 = vcombine.high %v831, %v831
        %901 = vrot.lane.b32.xlu0 %v831, 96
        %v902 = vpop.permute.xlu0 %901
        %903 = vrot.lane.b32.xlu0 %v900, 96
        %v904 = vpop.permute.xlu0 %903
        %vm905 = vcmask 785408
        %v906 = vsel %vm905, %v902, %v904
        %v908 = vadd.f32 %v894, %v906
        %v909 = vmax.f32 %v908, 0.0
        %910 = vst [vmem:[%s281] sm:$0xf] %v909
        %s911 = sand.u32 %s176, 1
        %s912 = scalar_lea.sflag [#allocation7], %s911
        %s913 = sand.u32 %s176, 1
        %s914 = smul.addr %s913, 4
        %s915 = scalar_lea.vmem [#allocation8], %s914
        // Predicated region
        $region57: #{tpu_custom_call.1} parent=43 // pred_check
          %p916 = pneg %p186
        $region58: #{tpu_custom_call.1} parent=43 // pred_check_branch
          %918 = sbr.rel (%p916) target = $region60
        $region59: #{tpu_custom_call.1} parent=43 // pred_region
          %s920 = ssub.s32 64, 64
          %921 = vsyncadd %s912, %s920
          %s922 = smul.addr %s27, 2
          %s923 = sadd.s32 %s28, %s922
          %s924 = smul.addr %s923, 64
          %s925 = scalar_lea.hbm %s6, %s924
          %s927 = sshll.u32 %s915, 4
          %s928 = int_to_ptr.vmem [resolvable:$true] %s927
          %930 = dma.vmem_to_hbm [thread:$0]  %s928, 64, %s925, %s912
        $region60: #{tpu_custom_call.1} parent=43 // pred_fallthru
          _
      $region44: #{tpu_custom_call.1} parent=5 // pred_fallthru
        _
      %p931 = scmp.le.s32.totalorder 2, %s18
      // Predicated region
      $region61: #{tpu_custom_call.1} parent=5 // pred_check
        %p932 = pneg %p931
      $region62: #{tpu_custom_call.1} parent=5 // pred_check_branch
        %934 = sbr.rel (%p932) target = $region64
      $region63: #{tpu_custom_call.1} parent=5 // pred_region
        %s935 = ssub.s32 %s18, 2
        // Predicated region
        $region65: #{tpu_custom_call.1} parent=63 // pred_check
          %p936 = pneg %p192
        $region66: #{tpu_custom_call.1} parent=63 // pred_check_branch
          %938 = sbr.rel (%p936) target = $region68
        $region67: #{tpu_custom_call.1} parent=63 // pred_region
          %s939 = sand.u32 %s177, 1
          %s940 = scalar_lea.sflag [#allocation7], %s939
          %s941 = sand.u32 %s177, 1
          %s942 = smul.addr %s941, 4
          %s943 = scalar_lea.vmem [#allocation8], %s942
          %944 = dma.done %s940, 64
        $region68: #{tpu_custom_call.1} parent=63 // pred_fallthru
          _
      $region64: #{tpu_custom_call.1} parent=5 // pred_fallthru
        _
    $region6: #{tpu_custom_call.1} parent=1 // loop_footer
      %s22 = sadd.s32 1, %s18
    $region7: #{tpu_custom_call.1} parent=1 // loop_footer_branch
      %17 = sbr.rel target = $region3
    $region8: #{tpu_custom_call.1} parent=1 // loop_exit
      _
    %945 = vsyncpa [#allocation6], 1
    %s946 = scalar_lea.sflag [#allocation6], 1
    %947 = vsyncpa %s946, 1
    %948 = vsyncpa [#allocation7], 1
    %s949 = scalar_lea.sflag [#allocation7], 1
    %950 = vsyncpa %s949, 1

</llo_original>
